<compile_context>
chip_gen: v5e
topology: v5e:2x2
jax: 0.10.0
libtpu: 0.0.40
codegen_flags: <defaults>
</compile_context>

<pallas_src>
import functools

import jax
import jax.numpy as jnp
from jax.experimental import pallas as pl
from jax.experimental.pallas import tpu as pltpu


def _hard_ce_kernel(pred_ref, label_ref, out_ref, *, n_rows: int):
    """One (tm, C) row strip -> one dense (1, 8, 128) block holding the
    partial sum of per-row losses (rows >= n_rows masked to zero)."""
    i = pl.program_id(0)

    pred = pred_ref[...].astype(jnp.float32)     # (tm, C)
    label = label_ref[...].astype(jnp.float32)   # (tm, C)
    tm, c = pred.shape

    # Mask padded tail rows before any transcendental so garbage HBM contents
    # in the tail block can never produce NaN/Inf.
    row = jax.lax.broadcasted_iota(jnp.int32, (tm, 1), 0) + i * tm
    valid = row < n_rows                          # (tm, 1)
    pred = jnp.where(valid, pred, jnp.float32(0.0))
    label = jnp.where(valid, label, jnp.float32(0.0))

    col = jax.lax.broadcasted_iota(jnp.int32, (tm, c), 1)

    # argmax(label, -1): first index attaining the row max (torch.max semantics)
    max_lab = jnp.max(label, axis=-1, keepdims=True)
    idx = jnp.min(jnp.where(label == max_lab, col, c), axis=-1, keepdims=True)

    # target logit via masked max-reduce (single pass, no float one-hot)
    tgt = jnp.max(jnp.where(col == idx, pred, -jnp.inf), axis=-1, keepdims=True)

    # numerically stable log-sum-exp over classes
    m = jnp.max(pred, axis=-1, keepdims=True)
    lse = m + jnp.log(jnp.sum(jnp.exp(pred - m), axis=-1, keepdims=True))

    losses = jnp.where(valid, lse - tgt, jnp.float32(0.0))   # (tm, 1)
    partial = jnp.sum(losses)                                 # scalar per block

    # Dense, unmasked single-vreg store; wrapper reads element [i, 0, 0].
    out_ref[...] = jnp.full((1, 8, 128), partial, dtype=jnp.float32)


def _vmem_capacity_bytes() -> int:
    try:
        return int(pltpu.get_tpu_info().vmem_capacity_bytes)
    except Exception:
        return 64 << 20   # conservative: v7x per-TC capacity


def _choose_tm(n: int, c: int, target_tile_bytes: int) -> int:
    """Largest row tile (multiple of 8) with ~target_tile_bytes per input tile,
    split further so the parallel grid has >= 2 blocks when N allows (v7x)."""
    rows = max(8, (target_tile_bytes // (c * 4)) // 8 * 8)
    n_pad = ((n + 7) // 8) * 8
    tm = int(min(rows, n_pad))
    # Ensure at least 2 grid blocks so both v7x TensorCores stream HBM.
    while tm > 8 and pl.cdiv(n, tm) < 2:
        tm = max(8, ((tm // 2) + 7) // 8 * 8)
    return tm


def hard_cross_entropy(pred, label, *, tm=None, target_tile_bytes=None):
    """pred, label: (N, C) float arrays. Returns scalar mean cross-entropy."""
    N, C = pred.shape
    assert label.shape == (N, C)

    vmem_cap = _vmem_capacity_bytes()
    if target_tile_bytes is None:
        # v5e/v6e (128 MiB VMEM): ~4 MiB input tiles; v7x (64 MiB): ~2 MiB.
        target_tile_bytes = (4 << 20) if vmem_cap >= (100 << 20) else (2 << 20)

    if tm is None:
        tm = _choose_tm(N, C, target_tile_bytes)
    num_blocks = pl.cdiv(N, tm)

    # Accurate VMEM budget: double-buffered input tiles + tiny output blocks
    # + headroom for Mosaic internal scratch; keep clear of the physical cap.
    in_buf_bytes = 2 * 2 * tm * C * 4
    out_buf_bytes = 2 * 8 * 128 * 4
    budget = in_buf_bytes + out_buf_bytes + (8 << 20)
    cap = max(vmem_cap - (12 << 20), 16 << 20)
    vmem_limit = int(min(max(budget, 16 << 20), cap))

    kernel = functools.partial(_hard_ce_kernel, n_rows=N)

    per_block = pl.pallas_call(
        kernel,
        out_shape=jax.ShapeDtypeStruct((num_blocks, 8, 128), jnp.float32),
        grid_spec=pltpu.PrefetchScalarGridSpec(
            num_scalar_prefetch=0,
            grid=(num_blocks,),
            in_specs=[
                pl.BlockSpec((tm, C), lambda i: (i, 0)),
                pl.BlockSpec((tm, C), lambda i: (i, 0)),
            ],
            out_specs=pl.BlockSpec((1, 8, 128), lambda i: (i, 0, 0)),
        ),
        compiler_params=pltpu.CompilerParams(
            dimension_semantics=("parallel",),
            vmem_limit_bytes=vmem_limit,
        ),
    )(pred, label)

    # One exact partial sum per block; padded rows contributed exactly 0.
    return jnp.sum(per_block[:, 0, 0]) / jnp.float32(N)


if __name__ == "__main__":
    key = jax.random.PRNGKey(0)
    k_pred, k_label = jax.random.split(key)

    N, C = 16, 32
    pred = jax.random.normal(k_pred, (N, C), dtype=jnp.float32)
    # soft labels (e.g. smoothed one-hot); only their argmax matters
    label = jax.random.uniform(k_label, (N, C), dtype=jnp.float32)

    loss = jax.block_until_ready(hard_cross_entropy(pred, label))

    # plain-JAX reference for sanity
    tgt = jnp.argmax(label, axis=-1)
    ref = jnp.mean(
        jax.nn.logsumexp(pred, axis=-1)
        - jnp.take_along_axis(pred, tgt[:, None], axis=-1)[:, 0]
    )
    assert jnp.allclose(loss, ref, rtol=1e-5, atol=1e-5), (loss, ref)

    print("KERNEL_OK")
</pallas_src>

<mosaic_0001>
module attributes {stable_mosaic.version = 11 : i64} {
  func.func @_hard_ce_kernel(%arg0: i32, %arg1: memref<8x32xf32, #tpu.memory_space<vmem>>, %arg2: memref<8x32xf32, #tpu.memory_space<vmem>>, %arg3: memref<1x8x128xf32, #tpu.memory_space<vmem>>) attributes {dimension_semantics = [#tpu.dimension_semantics<parallel>], iteration_bounds = array<i64: 2>, scalar_prefetch = 0 : i64, scratch_operands = 0 : i64, tpu.core_type = #tpu.core_type<tc>, window_params = [{transform_indices = @transform_0, window_bounds = array<i64: 8, 32>}, {transform_indices = @transform_1, window_bounds = array<i64: 8, 32>}, {transform_indices = @transform_2, window_bounds = array<i64: 1, 8, 128>}]} {
    %c0 = arith.constant 0 : index
    %c0_0 = arith.constant 0 : index
    %0 = vector.load %arg1[%c0, %c0_0] : memref<8x32xf32, #tpu.memory_space<vmem>>, vector<8x32xf32>
    %c0_1 = arith.constant 0 : index
    %c0_2 = arith.constant 0 : index
    %1 = vector.load %arg2[%c0_1, %c0_2] : memref<8x32xf32, #tpu.memory_space<vmem>>, vector<8x32xf32>
    %2 = tpu.iota {dimensions = array<i32: 0>} : vector<8x1xi32>
    %c8_i32 = arith.constant 8 : i32
    %3 = arith.muli %arg0, %c8_i32 : i32
    %4 = vector.broadcast %3 : i32 to vector<8x1xi32>
    %5 = arith.addi %2, %4 : vector<8x1xi32>
    %c16_i32 = arith.constant 16 : i32
    %6 = vector.broadcast %c16_i32 : i32 to vector<8x1xi32>
    %7 = arith.cmpi slt, %5, %6 : vector<8x1xi32>
    %cst = arith.constant 0.000000e+00 : f32
    %8 = vector.shape_cast %7 : vector<8x1xi1> to vector<8x1xi1>
    %9 = vector.broadcast %8 : vector<8x1xi1> to vector<8x32xi1>
    %10 = vector.broadcast %cst : f32 to vector<8x32xf32>
    %11 = arith.select %9, %0, %10 : vector<8x32xi1>, vector<8x32xf32>
    %cst_3 = arith.constant 0.000000e+00 : f32
    %12 = vector.shape_cast %7 : vector<8x1xi1> to vector<8x1xi1>
    %13 = vector.broadcast %12 : vector<8x1xi1> to vector<8x32xi1>
    %14 = vector.broadcast %cst_3 : f32 to vector<8x32xf32>
    %15 = arith.select %13, %1, %14 : vector<8x32xi1>, vector<8x32xf32>
    %16 = tpu.iota {dimensions = array<i32: 1>} : vector<8x32xi32>
    %cst_4 = arith.constant dense<0xFF800000> : vector<8xf32>
    %17 = vector.multi_reduction <maximumf>, %15, %cst_4 [1] : vector<8x32xf32> to vector<8xf32>
    %18 = vector.shape_cast %17 : vector<8xf32> to vector<8x1xf32>
    %19 = vector.broadcast %18 : vector<8x1xf32> to vector<8x32xf32>
    %20 = arith.cmpf oeq, %15, %19 : vector<8x32xf32>
    %c32_i32 = arith.constant 32 : i32
    %21 = vector.broadcast %c32_i32 : i32 to vector<8x32xi32>
    %22 = arith.select %20, %16, %21 : vector<8x32xi1>, vector<8x32xi32>
    %cst_5 = arith.constant dense<2147483647> : vector<8xi32>
    %23 = vector.multi_reduction <minsi>, %22, %cst_5 [1] : vector<8x32xi32> to vector<8xi32>
    %24 = vector.shape_cast %23 : vector<8xi32> to vector<8x1xi32>
    %25 = vector.broadcast %24 : vector<8x1xi32> to vector<8x32xi32>
    %26 = arith.cmpi eq, %16, %25 : vector<8x32xi32>
    %cst_6 = arith.constant 0xFF800000 : f32
    %27 = vector.broadcast %cst_6 : f32 to vector<8x32xf32>
    %28 = arith.select %26, %11, %27 : vector<8x32xi1>, vector<8x32xf32>
    %cst_7 = arith.constant dense<0xFF800000> : vector<8xf32>
    %29 = vector.multi_reduction <maximumf>, %28, %cst_7 [1] : vector<8x32xf32> to vector<8xf32>
    %30 = vector.shape_cast %29 : vector<8xf32> to vector<8x1xf32>
    %cst_8 = arith.constant dense<0xFF800000> : vector<8xf32>
    %31 = vector.multi_reduction <maximumf>, %11, %cst_8 [1] : vector<8x32xf32> to vector<8xf32>
    %32 = vector.shape_cast %31 : vector<8xf32> to vector<8x1xf32>
    %33 = vector.broadcast %32 : vector<8x1xf32> to vector<8x32xf32>
    %34 = arith.subf %11, %33 : vector<8x32xf32>
    %35 = math.exp %34 : vector<8x32xf32>
    %cst_9 = arith.constant dense<0.000000e+00> : vector<8xf32>
    %36 = vector.multi_reduction <add>, %35, %cst_9 [1] : vector<8x32xf32> to vector<8xf32>
    %37 = vector.shape_cast %36 : vector<8xf32> to vector<8x1xf32>
    %38 = math.log %37 : vector<8x1xf32>
    %39 = arith.addf %32, %38 : vector<8x1xf32>
    %40 = arith.subf %39, %30 : vector<8x1xf32>
    %cst_10 = arith.constant 0.000000e+00 : f32
    %41 = vector.broadcast %cst_10 : f32 to vector<8x1xf32>
    %42 = arith.select %7, %40, %41 : vector<8x1xi1>, vector<8x1xf32>
    %43 = vector.shape_cast %42 : vector<8x1xf32> to vector<1x8x1xf32>
    %cst_11 = arith.constant dense<0.000000e+00> : vector<1xf32>
    %44 = vector.multi_reduction <add>, %43, %cst_11 [1, 2] : vector<1x8x1xf32> to vector<1xf32>
    %45 = vector.shape_cast %44 : vector<1xf32> to vector<1x1x1xf32>
    %46 = vector.extract %45[0, 0, 0] : f32 from vector<1x1x1xf32>
    %47 = vector.broadcast %46 : f32 to vector<1x8x128xf32>
    %c0_12 = arith.constant 0 : index
    %c0_13 = arith.constant 0 : index
    %c0_14 = arith.constant 0 : index
    %48 = vector.load %arg3[%c0_12, %c0_13, %c0_14] : memref<1x8x128xf32, #tpu.memory_space<vmem>>, vector<1x8x128xf32>
    tpu.vector_store %arg3[%c0_12, %c0_13, %c0_14], %47 {strides = array<i32>} : memref<1x8x128xf32, #tpu.memory_space<vmem>>, vector<1x8x128xf32>,
    return
  }
  func.func @transform_0(%arg0: i32) -> (i32, i32) {
    %c0_i32 = arith.constant 0 : i32
    %c0_i32_0 = arith.constant 0 : i32
    return %arg0, %c0_i32 : i32, i32
  }
  func.func @transform_1(%arg0: i32) -> (i32, i32) {
    %c0_i32 = arith.constant 0 : i32
    %c0_i32_0 = arith.constant 0 : i32
    return %arg0, %c0_i32 : i32, i32
  }
  func.func @transform_2(%arg0: i32) -> (i32, i32, i32) {
    %c0_i32 = arith.constant 0 : i32
    %c0_i32_0 = arith.constant 0 : i32
    %c0_i32_1 = arith.constant 0 : i32
    return %arg0, %c0_i32, %c0_i32_0 : i32, i32, i32
  }
}

</mosaic_0001>

<llo_original>
// kernel: tpu_custom_call.1
$region0: #{tpu_custom_call.1}
  #allocation0 [shape = 'u32[]', space=smem, size = 0x4, offset = 0x4, fixed_abs, tag = 'smem constant byte address 0x4 - core index']
  #allocation1 [shape = 'u32[72,128]{1,0:T(1,128)}', space=vmem, size = 0x9000, scoped, tag = 'internal scratch']
  %s0 = inlined_call_operand.hbm [shape: f32[16,32], index: 0, kind: input, shape index: {}]
  %s1 = inlined_call_operand.hbm [shape: f32[16,32], index: 1, kind: input, shape index: {}]
  %s2 = inlined_call_operand.hbm [shape: f32[2,8,128], index: 2, kind: output, shape index: {}]
  %s3 = sld [smem:[#allocation0]]
  $region49: #{tpu_custom_call.1} parent=0
    _
  %s5 = ssub.s32 1, %s3
  %s6 = scalar_select 0, %s5, %s3
  $region1: #{tpu_custom_call.1} parent=0
    #allocation2 [shape = 'u8[8192]{0}', space=vmem, size = 0x2000, scoped, tag = 'input window, operand 0']
    #allocation3 [shape = 's32[2]{0}', space=sflag, size = 0x8, scoped, tag = 'scoped memory for tpu_custom_call.1']
    #allocation4 [shape = 's32[2]{0}', space=sflag, size = 0x8, scoped, tag = 'scoped memory for tpu_custom_call.1']
    #allocation5 [shape = 'u8[8192]{0}', space=vmem, size = 0x2000, scoped, tag = 'input window, operand 1']
    #allocation6 [shape = 's32[2]{0}', space=sflag, size = 0x8, scoped, tag = 'scoped memory for tpu_custom_call.1']
    #allocation7 [shape = 'u8[8192]{0}', space=vmem, size = 0x2000, scoped, tag = 'output window, operand 0']
    %7 = vsyncpa [#allocation3], 0
    %s8 = scalar_lea.sflag [#allocation3], 1
    %9 = vsyncpa %s8, 0
    %10 = vsyncpa [#allocation6], 0
    %s11 = scalar_lea.sflag [#allocation6], 1
    %12 = vsyncpa %s11, 0
    %13 = vsyncpa [#allocation4], 0
    %s14 = scalar_lea.sflag [#allocation4], 1
    %15 = vsyncpa %s14, 0
    loop: start=0, step=1, limit=4
    $region2: #{tpu_custom_call.1} parent=1 // loop_pre_header
      _
    $region3: #{tpu_custom_call.1} parent=1 // loop_header
      %s17 = sphi 0, %s21
      %p18 = scmp.ge.s32.totalorder %s17, 4
      %s27 = sphi 0, %s29
      %s30 = sphi 0, %s27
      %s31 = sphi 0, %s30
      %s47 = sphi 0, %s31
      %s53 = sphi 0, %s55
      %s56 = sphi 0, %s53
      %s57 = sphi 0, %s56
      %s73 = sphi 0, %s57
      %s79 = sphi 0, %s81
      %s82 = sphi 0, %s79
      %s83 = sphi 0, %s82
      %s99 = sphi 0, %s83
    $region4: #{tpu_custom_call.1} parent=1 // loop_header_branch
      %20 = sbr.rel (%p18) target = $region8
    $region5: #{tpu_custom_call.1} parent=1 // loop_body
      %s22 = ssub.s32 %s17, 1
      %s23 = ssub.s32 %s17, 2
      %s24 = sadd.s32 %s17, 1
      %s25 = ssub.s32 %s17, %s24
      %p26 = scmp.eq.s32.totalorder %s25, 0
      %s28 = sadd.s32 %s27, 1
      %s29 = scalar_select %p26, %s27, %s28
      %p32 = pneg %p26
      %p33 = scmp.eq.s32.totalorder %s17, 1
      %p34 = por %p32, %p33
      %p35 = scmp.ne.s32.totalorder %s27, %s30
      %p36 = scmp.eq.s32.totalorder %s17, 0
      %p37 = por %p35, %p36
      %p38 = scmp.ne.s32.totalorder %s27, %s30
      %p39 = scmp.eq.s32.totalorder %s22, 1
      %p40 = por %p38, %p39
      %p41 = scmp.ne.s32.totalorder %s30, %s31
      %p42 = scmp.eq.s32.totalorder %s22, 0
      %p43 = por %p41, %p42
      %p44 = scmp.ne.s32.totalorder %s30, %s31
      %p45 = scmp.eq.s32.totalorder %s23, 1
      %p46 = por %p44, %p45
      %p48 = scmp.ne.s32.totalorder %s31, %s47
      %p49 = scmp.eq.s32.totalorder %s23, 0
      %p50 = por %p48, %p49
      %s51 = ssub.s32 %s17, %s24
      %p52 = scmp.eq.s32.totalorder %s51, 0
      %s54 = sadd.s32 %s53, 1
      %s55 = scalar_select %p52, %s53, %s54
      %p58 = pneg %p52
      %p59 = scmp.eq.s32.totalorder %s17, 1
      %p60 = por %p58, %p59
      %p61 = scmp.ne.s32.totalorder %s53, %s56
      %p62 = scmp.eq.s32.totalorder %s17, 0
      %p63 = por %p61, %p62
      %p64 = scmp.ne.s32.totalorder %s53, %s56
      %p65 = scmp.eq.s32.totalorder %s22, 1
      %p66 = por %p64, %p65
      %p67 = scmp.ne.s32.totalorder %s56, %s57
      %p68 = scmp.eq.s32.totalorder %s22, 0
      %p69 = por %p67, %p68
      %p70 = scmp.ne.s32.totalorder %s56, %s57
      %p71 = scmp.eq.s32.totalorder %s23, 1
      %p72 = por %p70, %p71
      %p74 = scmp.ne.s32.totalorder %s57, %s73
      %p75 = scmp.eq.s32.totalorder %s23, 0
      %p76 = por %p74, %p75
      %s77 = ssub.s32 %s17, %s24
      %p78 = scmp.eq.s32.totalorder %s77, 0
      %s80 = sadd.s32 %s79, 1
      %s81 = scalar_select %p78, %s79, %s80
      %p84 = pneg %p78
      %p85 = scmp.eq.s32.totalorder %s17, 1
      %p86 = por %p84, %p85
      %p87 = scmp.ne.s32.totalorder %s79, %s82
      %p88 = scmp.eq.s32.totalorder %s17, 0
      %p89 = por %p87, %p88
      %p90 = scmp.ne.s32.totalorder %s79, %s82
      %p91 = scmp.eq.s32.totalorder %s22, 1
      %p92 = por %p90, %p91
      %p93 = scmp.ne.s32.totalorder %s82, %s83
      %p94 = scmp.eq.s32.totalorder %s22, 0
      %p95 = por %p93, %p94
      %p96 = scmp.ne.s32.totalorder %s82, %s83
      %p97 = scmp.eq.s32.totalorder %s23, 1
      %p98 = por %p96, %p97
      %p100 = scmp.ne.s32.totalorder %s83, %s99
      %p101 = scmp.eq.s32.totalorder %s23, 0
      %p102 = por %p100, %p101
      %p103 = scmp.le.s32.totalorder 1, %s17
      %p104 = scmp.lt.s32.totalorder %s17, 3
      %p105 = pnand %p103, %p104
      %p106 = pneg %p105
      // Predicated region
      $region9: #{tpu_custom_call.1} parent=5 // pred_check
        _
      $region10: #{tpu_custom_call.1} parent=5 // pred_check_branch
        %108 = sbr.rel (%p105) target = $region12
      $region11: #{tpu_custom_call.1} parent=5 // pred_region
        %s109 = ssub.s32 %s17, 1
      $region12: #{tpu_custom_call.1} parent=5 // pred_fallthru
        _
      %p110 = scmp.lt.s32.totalorder %s17, 2
      // Predicated region
      $region13: #{tpu_custom_call.1} parent=5 // pred_check
        %p111 = pneg %p110
      $region14: #{tpu_custom_call.1} parent=5 // pred_check_branch
        %113 = sbr.rel (%p111) target = $region16
      $region15: #{tpu_custom_call.1} parent=5 // pred_region
        // Predicated region
        $region17: #{tpu_custom_call.1} parent=15 // pred_check
          %p114 = pneg %p37
        $region18: #{tpu_custom_call.1} parent=15 // pred_check_branch
          %116 = sbr.rel (%p114) target = $region20
        $region19: #{tpu_custom_call.1} parent=15 // pred_region
          %s117 = sand.u32 %s27, 1
          %s118 = scalar_lea.sflag [#allocation3], %s117
          %s119 = sand.u32 %s27, 1
          %s120 = smul.addr %s119, 8
          %s121 = scalar_lea.vmem [#allocation2], %s120
          %123 = vsyncadd %s118, 0
          %s124 = smul.addr %s17, 8
          %s125 = scalar_lea.hbm %s0, %s124
          %s127 = sshll.u32 %s125, 4
          %s128 = int_to_ptr.hbm [resolvable:$true] %s127
          %s129 = sshll.u32 %s121, 4
          %s130 = int_to_ptr.vmem [resolvable:$true] %s129
          %132 = dma.hbm_to_vmem [thread:$0]  %s128, 128, %s130, %s118
        $region20: #{tpu_custom_call.1} parent=15 // pred_fallthru
          _
        // Predicated region
        $region21: #{tpu_custom_call.1} parent=15 // pred_check
          %p133 = pneg %p63
        $region22: #{tpu_custom_call.1} parent=15 // pred_check_branch
          %135 = sbr.rel (%p133) target = $region24
        $region23: #{tpu_custom_call.1} parent=15 // pred_region
          %s136 = sand.u32 %s53, 1
          %s137 = scalar_lea.sflag [#allocation6], %s136
          %s138 = sand.u32 %s53, 1
          %s139 = smul.addr %s138, 8
          %s140 = scalar_lea.vmem [#allocation5], %s139
          %142 = vsyncadd %s137, 0
          %s143 = smul.addr %s17, 8
          %s144 = scalar_lea.hbm %s1, %s143
          %s146 = sshll.u32 %s144, 4
          %s147 = int_to_ptr.hbm [resolvable:$true] %s146
          %s148 = sshll.u32 %s140, 4
          %s149 = int_to_ptr.vmem [resolvable:$true] %s148
          %151 = dma.hbm_to_vmem [thread:$0]  %s147, 128, %s149, %s137
        $region24: #{tpu_custom_call.1} parent=15 // pred_fallthru
          _
      $region16: #{tpu_custom_call.1} parent=5 // pred_fallthru
        _
      %p152 = scmp.le.s32.totalorder 1, %s17
      %p153 = scmp.lt.s32.totalorder %s17, 3
      %p154 = pnand %p152, %p153
      %p155 = pneg %p154
      // Predicated region
      $region25: #{tpu_custom_call.1} parent=5 // pred_check
        _
      $region26: #{tpu_custom_call.1} parent=5 // pred_check_branch
        %157 = sbr.rel (%p154) target = $region28
      $region27: #{tpu_custom_call.1} parent=5 // pred_region
        %s158 = ssub.s32 %s17, 1
        %s159 = sand.u32 %s30, 1
        %s160 = scalar_lea.sflag [#allocation3], %s159
        %s161 = sand.u32 %s30, 1
        %s162 = smul.addr %s161, 8
        %s163 = scalar_lea.vmem [#allocation2], %s162
        // Predicated region
        $region29: #{tpu_custom_call.1} parent=27 // pred_check
          %p164 = pneg %p43
        $region30: #{tpu_custom_call.1} parent=27 // pred_check_branch
          %166 = sbr.rel (%p164) target = $region32
        $region31: #{tpu_custom_call.1} parent=27 // pred_region
          %168 = dma.done %s160, 128
        $region32: #{tpu_custom_call.1} parent=27 // pred_fallthru
          _
        %s169 = sand.u32 %s56, 1
        %s170 = scalar_lea.sflag [#allocation6], %s169
        %s171 = sand.u32 %s56, 1
        %s172 = smul.addr %s171, 8
        %s173 = scalar_lea.vmem [#allocation5], %s172
        // Predicated region
        $region33: #{tpu_custom_call.1} parent=27 // pred_check
          %p174 = pneg %p69
        $region34: #{tpu_custom_call.1} parent=27 // pred_check_branch
          %176 = sbr.rel (%p174) target = $region36
        $region35: #{tpu_custom_call.1} parent=27 // pred_region
          %178 = dma.done %s170, 128
        $region36: #{tpu_custom_call.1} parent=27 // pred_fallthru
          _
        %s179 = sand.u32 %s30, 1
        %s180 = scalar_lea.sflag [#allocation3], %s179
        %s181 = sand.u32 %s30, 1
        %s182 = smul.addr %s181, 8
        %s183 = scalar_lea.vmem [#allocation2], %s182
        %p184 = pneg %p43
        %p185 = pneg %p40
        %s186 = sand.u32 %s56, 1
        %s187 = scalar_lea.sflag [#allocation6], %s186
        %s188 = sand.u32 %s56, 1
        %s189 = smul.addr %s188, 8
        %s190 = scalar_lea.vmem [#allocation5], %s189
        %p191 = pneg %p69
        %p192 = pneg %p66
        %p193 = pneg %p95
        %p194 = pneg %p92
        %s195 = sand.u32 %s82, 1
        %s196 = scalar_lea.sflag [#allocation4], %s195
        %s197 = sand.u32 %s82, 1
        %s198 = smul.addr %s197, 8
        %s199 = scalar_lea.vmem [#allocation7], %s198
        %v200 = vld [vmem:[%s163] sm:$0xff]
        %v201 = vld [vmem:[%s173] sm:$0xff]
        %v202 = vlaneseq
        %v203 = vshrl.u32 %v202, 7
        %s204 = smul.u32 %s22, 8
        %v205 = vstv %s204
        %v206 = vadd.s32 %v203, %v205
        %vm207 = vcmp.lt.s32.totalorder %v206, 16
        %v208 = vsel %vm207, 1, 0
        %vm209 = vcmp.eq.s32.totalorder %v208, 1
        %v210 = vsel %vm209, %v200, 0.0
        %v211 = vsel %vm209, %v201, 0.0
        %v212 = vlaneseq
        %v213 = vand.u32 %v212, 127
        %vm214 = vcmask 261120
        %v215 = vsel %vm214, %v211, -inf
        %216 = vmax.xlane.f32.xlu0 %v215
        %v217 = vpop.xlane.xlu0 %216
        %vm218 = vcmp.eq.f32.partialorder %v211, %v217
        %v219 = vsel %vm218, %v213, 32
        %v220 = vsel %vm214, %v219, 2147483647
        %v221 = vand.u32 %v220, 65535
        %v222 = vshra.s32 %v220, 16
        %v223 = vcvt.s32.f32 %v221
        %v224 = vcvt.s32.f32 %v222
        %225 = vmin.xlane.f32.xlu0 %v224
        %v226 = vpop.xlane.xlu0 %225
        %vm227 = vcmp.eq.f32.partialorder %v224, %v226
        %v228 = vsel %vm227, %v223, inf
        %229 = vmin.xlane.f32.xlu0 %v228
        %v230 = vpop.xlane.xlu0 %229
        %v231 = vcvt.f32.s32 %v230
        %v232 = vcvt.f32.s32 %v226
        %v233 = vshll.u32 %v232, 16
        %v234 = vadd.s32 %v233, %v231
        %vm235 = vcmp.eq.s32.totalorder %v213, %v234
        %v236 = vsel %vm235, %v210, -inf
        %v237 = vsel %vm214, %v236, -inf
        %238 = vmax.xlane.f32.xlu0 %v237
        %v239 = vpop.xlane.xlu0 %238
        %v240 = vsel %vm214, %v210, -inf
        %241 = vmax.xlane.f32.xlu0 %v240
        %v242 = vpop.xlane.xlu0 %241
        %v243 = vsub.f32 %v210, %v242
        %v244 = vmul.f32 %v243, 1.442695
        %v245 = vpow.pop %v244
        %v246 = vsel %vm214, %v245, 0.0
        %247 = vadd.xlane.f32.xlu0 %v246
        %v248 = vpop.xlane.xlu0 %247
        %v249 = vlog2.pop %v248
        %v250 = vmul.f32 %v249, 0.6931472
        %v251 = vadd.f32 %v242, %v250
        %v252 = vsub.f32 %v251, %v239
        %v253 = vsel %vm207, %v252, 0.0
        %vm254 = vcmask 7168
        %v255 = vsel %vm254, %v253, 0.0
        %256 = vadd.xlane.f32.xlu0 %v255
        %v257 = vpop.xlane.xlu0 %256
        %v258 = vrot.slane %v257, 4
        %v259 = vadd.f32 %v257, %v258
        %v260 = vrot.slane %v259, 2
        %v261 = vadd.f32 %v259, %v260
        %v262 = vrot.slane %v261, 1
        %v263 = vadd.f32 %v261, %v262
        %s264 = vtos %v263
        %v265 = vstv %s264
        %266 = vst [vmem:[%s199] sm:$0xff] %v265
        %s267 = sand.u32 %s82, 1
        %s268 = scalar_lea.sflag [#allocation4], %s267
        %s269 = sand.u32 %s82, 1
        %s270 = smul.addr %s269, 8
        %s271 = scalar_lea.vmem [#allocation7], %s270
        // Predicated region
        $region37: #{tpu_custom_call.1} parent=27 // pred_check
          %p272 = pneg %p92
        $region38: #{tpu_custom_call.1} parent=27 // pred_check_branch
          %274 = sbr.rel (%p272) target = $region40
        $region39: #{tpu_custom_call.1} parent=27 // pred_region
          %276 = vsyncadd %s268, 0
          %s277 = smul.addr %s22, 8
          %s278 = scalar_lea.hbm %s2, %s277
          %s280 = sshll.u32 %s271, 4
          %s281 = int_to_ptr.vmem [resolvable:$true] %s280
          %s282 = sshll.u32 %s278, 4
          %s283 = int_to_ptr.hbm [resolvable:$true] %s282
          %285 = dma.vmem_to_hbm [thread:$0]  %s281, 128, %s283, %s268
        $region40: #{tpu_custom_call.1} parent=27 // pred_fallthru
          _
      $region28: #{tpu_custom_call.1} parent=5 // pred_fallthru
        _
      %p286 = scmp.le.s32.totalorder 2, %s17
      // Predicated region
      $region41: #{tpu_custom_call.1} parent=5 // pred_check
        %p287 = pneg %p286
      $region42: #{tpu_custom_call.1} parent=5 // pred_check_branch
        %289 = sbr.rel (%p287) target = $region44
      $region43: #{tpu_custom_call.1} parent=5 // pred_region
        %s290 = ssub.s32 %s17, 2
        // Predicated region
        $region45: #{tpu_custom_call.1} parent=43 // pred_check
          %p291 = pneg %p98
        $region46: #{tpu_custom_call.1} parent=43 // pred_check_branch
          %293 = sbr.rel (%p291) target = $region48
        $region47: #{tpu_custom_call.1} parent=43 // pred_region
          %s294 = sand.u32 %s83, 1
          %s295 = scalar_lea.sflag [#allocation4], %s294
          %s296 = sand.u32 %s83, 1
          %s297 = smul.addr %s296, 8
          %s298 = scalar_lea.vmem [#allocation7], %s297
          %300 = dma.done %s295, 128
        $region48: #{tpu_custom_call.1} parent=43 // pred_fallthru
          _
      $region44: #{tpu_custom_call.1} parent=5 // pred_fallthru
        _
    $region6: #{tpu_custom_call.1} parent=1 // loop_footer
      %s21 = sadd.s32 1, %s17
    $region7: #{tpu_custom_call.1} parent=1 // loop_footer_branch
      %16 = sbr.rel target = $region3
    $region8: #{tpu_custom_call.1} parent=1 // loop_exit
      _
    %301 = vsyncpa [#allocation3], 1
    %s302 = scalar_lea.sflag [#allocation3], 1
    %303 = vsyncpa %s302, 1
    %304 = vsyncpa [#allocation6], 1
    %s305 = scalar_lea.sflag [#allocation6], 1
    %306 = vsyncpa %s305, 1
    %307 = vsyncpa [#allocation4], 1
    %s308 = scalar_lea.sflag [#allocation4], 1
    %309 = vsyncpa %s308, 1

</llo_original>
